<compile_context>
chip_gen: v5e
topology: v5e:2x2
jax: 0.10.0
libtpu: 0.0.40
codegen_flags: <defaults>
</compile_context>

<pallas_src>
import jax
import jax.numpy as jnp
from jax.experimental import pallas as pl
from jax.experimental.pallas import tpu as pltpu


def _round_up(x: int, m: int) -> int:
    return ((x + m - 1) // m) * m


def _pick_tile(size: int, cap: int, *, pad_slack: int = 8) -> int:
    """Largest tile from a /2 ladder (<= cap) that wastes <= pad_slack rows."""
    ladder = [t for t in (512, 256, 128, 64, 32, 16, 8) if t <= cap]
    for t in ladder:
        if _round_up(size, t) - size <= pad_slack:
            return t
    return 8


def _pick_lane_tile(padded: int, cap: int) -> int:
    """Largest of {512,256,128} (<= cap) that divides `padded` (a 128-multiple)."""
    for t in (512, 256, 128):
        if t <= cap and padded % t == 0:
            return t
    return 128


# ----------------------------------------------------------------------------
# Kernels
# ----------------------------------------------------------------------------
def _linear_kernel_resident_w(x_ref, wt_ref, b_ref, o_ref):
    # x_ref: (tm, K_pad), wt_ref: (K_pad, N_pad) resident, b_ref: (1, N_pad)
    # o_ref: (tm, N_pad).  Single K tile -> no accumulator, no pl.when.
    o_ref[...] = (
        jnp.dot(x_ref[...], wt_ref[...], preferred_element_type=jnp.float32)
        + b_ref[...].astype(jnp.float32)
    ).astype(o_ref.dtype)


def _linear_kernel_kred(x_ref, wt_ref, b_ref, o_ref, acc_ref):
    # x_ref: (tm, tk), wt_ref: (tk, tn), b_ref: (1, tn),
    # o_ref: (tm, tn), acc_ref: (tm, tn) f32 scratch.
    k = pl.program_id(2)

    @pl.when(k == 0)
    def _():
        # Fold bias into the accumulator init (no zeros store + epilogue add).
        acc_ref[...] = jnp.broadcast_to(
            b_ref[...].astype(jnp.float32), acc_ref.shape
        )

    acc_ref[...] += jnp.dot(
        x_ref[...], wt_ref[...], preferred_element_type=jnp.float32
    )

    @pl.when(k == pl.num_programs(2) - 1)
    def _():
        o_ref[...] = acc_ref[...].astype(o_ref.dtype)


# ----------------------------------------------------------------------------
# Pallas wrapper
# ----------------------------------------------------------------------------
def pallas_linear(
    x,
    weight,
    bias,
    *,
    tm_max=256,
    tn_max=256,
    tk_max=512,
    compute_dtype=None,
    resident_w_bytes=4 << 20,
):
    """F.linear(x, weight, bias) for x of shape (B, S, K).

    weight: (N, K), bias: (N,) — exactly as torch.nn.Linear stores them.
    The weight is transposed once to (K, N) so the in-kernel contraction is
    MXU-canonical; operands are zero-padded so every block is (8,128)-aligned
    and output stores are lane-dense.
    """
    B, S, K = x.shape
    N = weight.shape[0]
    M = B * S
    out_dtype = x.dtype

    # Lane-padded N/K, sublane-padded M (<= 8 rows of padding).
    N_pad = _round_up(N, 128)
    K_pad = _round_up(K, 128)
    tm = _pick_tile(M, tm_max)
    M_pad = _round_up(M, tm)

    x2d = jnp.pad(x.reshape(M, K), ((0, M_pad - M), (0, K_pad - K)))
    w_t = jnp.pad(weight.T, ((0, K_pad - K), (0, N_pad - N)))       # (K_pad, N_pad)
    b_p = jnp.pad(bias, (0, N_pad - N)).reshape(1, N_pad).astype(jnp.float32)

    if compute_dtype is not None:
        x2d = x2d.astype(compute_dtype)
        w_t = w_t.astype(compute_dtype)

    esize = jnp.dtype(x2d.dtype).itemsize
    weight_fits_vmem = (K_pad * N_pad * esize) <= resident_w_bytes

    if weight_fits_vmem:
        # --- Small/medium path: grid over M only, weight & bias resident. ---
        grid = (M_pad // tm,)
        out_pad = pl.pallas_call(
            _linear_kernel_resident_w,
            out_shape=jax.ShapeDtypeStruct((M_pad, N_pad), out_dtype),
            grid=grid,
            in_specs=[
                pl.BlockSpec((tm, K_pad), lambda i: (i, 0)),      # x tile (streamed)
                pl.BlockSpec((K_pad, N_pad), lambda i: (0, 0)),   # W resident
                pl.BlockSpec((1, N_pad), lambda i: (0, 0)),       # bias resident
            ],
            out_specs=pl.BlockSpec((tm, N_pad), lambda i: (i, 0)),
            compiler_params=pltpu.CompilerParams(
                dimension_semantics=("parallel",),
            ),
        )(x2d, w_t, b_p)
    else:
        # --- General path: (M, N, K) grid, K-reduction with f32 accumulator. ---
        tn = _pick_lane_tile(N_pad, tn_max)
        tk = _pick_lane_tile(K_pad, tk_max)
        grid = (M_pad // tm, N_pad // tn, K_pad // tk)
        out_pad = pl.pallas_call(
            _linear_kernel_kred,
            out_shape=jax.ShapeDtypeStruct((M_pad, N_pad), out_dtype),
            grid=grid,
            in_specs=[
                pl.BlockSpec((tm, tk), lambda i, j, k: (i, k)),   # x tile
                pl.BlockSpec((tk, tn), lambda i, j, k: (k, j)),   # W^T tile
                pl.BlockSpec((1, tn), lambda i, j, k: (0, j)),    # bias tile
            ],
            out_specs=pl.BlockSpec((tm, tn), lambda i, j, k: (i, j)),
            scratch_shapes=[pltpu.VMEM((tm, tn), jnp.float32)],
            compiler_params=pltpu.CompilerParams(
                dimension_semantics=("parallel", "parallel", "arbitrary"),
            ),
        )(x2d, w_t, b_p)

    return out_pad[:M, :N].reshape(B, S, N)


def linear(x, weight, bias, *, force_pallas=False, pallas_min_macs=1 << 20):
    """Dispatcher: tiny problems take the XLA-fused fast path (no pads, no
    custom-call launch); real sizes (or force_pallas=True) use the Pallas kernel."""
    B, S, K = x.shape
    N = weight.shape[0]
    macs = B * S * K * N
    if not force_pallas and macs < pallas_min_macs:
        return x @ weight.T + bias
    return pallas_linear(x, weight, bias)


# ----------------------------------------------------------------------------
# Model
# ----------------------------------------------------------------------------
class Model:
    """JAX/Pallas port of the PyTorch Model (Linear(2, 2); permute is dead code)."""

    def __init__(self, key):
        in_features, out_features = 2, 2
        kw, kb = jax.random.split(key)
        # Deterministic init mimicking torch.nn.Linear's uniform(-1/sqrt(K), 1/sqrt(K)).
        bound = 1.0 / (in_features ** 0.5)
        self.weight = jax.random.uniform(
            kw, (out_features, in_features), jnp.float32, -bound, bound
        )
        self.bias = jax.random.uniform(
            kb, (out_features,), jnp.float32, -bound, bound
        )

    def __call__(self, x1, *, force_pallas=False):
        # TODO(synk): x1.to('cpu') has no JAX equivalent (device placement is
        # handled by the runtime); it is a no-op for the math.
        v1 = linear(x1, self.weight, self.bias, force_pallas=force_pallas)
        # v2 = v1.permute(0, 2, 1) in the original module is unused; the
        # forward returns v1, so we do the same.
        return v1


if __name__ == "__main__":
    key = jax.random.PRNGKey(0)
    k_model, k_input = jax.random.split(key)

    model = Model(k_model)
    x1 = jax.random.normal(k_input, (1, 3, 2), dtype=jnp.float32)

    # Fast path (what production would use at this tiny size).
    out_fast = jax.block_until_ready(model(x1))

    # Forced Pallas path — exercises the kernel once.
    out_pallas = jax.block_until_ready(model(x1, force_pallas=True))

    # Sanity-check both against a plain-JAX reference.
    ref = x1 @ model.weight.T + model.bias
    assert out_fast.shape == (1, 3, 2)
    assert out_pallas.shape == (1, 3, 2)
    assert jnp.allclose(out_fast, ref, atol=1e-5, rtol=1e-5)
    assert jnp.allclose(out_pallas, ref, atol=1e-5, rtol=1e-5)

    print("KERNEL_OK")
</pallas_src>

<mosaic_0001>
module attributes {stable_mosaic.version = 11 : i64} {
  func.func @_linear_kernel_resident_w(%arg0: i32, %arg1: memref<8x128xf32, #tpu.memory_space<vmem>>, %arg2: memref<128x128xf32, #tpu.memory_space<vmem>>, %arg3: memref<1x128xf32, #tpu.memory_space<vmem>>, %arg4: memref<8x128xf32, #tpu.memory_space<vmem>>) attributes {dimension_semantics = [#tpu.dimension_semantics<parallel>], iteration_bounds = array<i64: 1>, scalar_prefetch = 0 : i64, scratch_operands = 0 : i64, tpu.core_type = #tpu.core_type<tc>, window_params = [{transform_indices = @transform_0, window_bounds = array<i64: 8, 128>}, {pipeline_mode = #tpu.pipeline_mode<synchronous>, transform_indices = @transform_1, window_bounds = array<i64: 128, 128>}, {pipeline_mode = #tpu.pipeline_mode<synchronous>, transform_indices = @transform_2, window_bounds = array<i64: 1, 128>}, {transform_indices = @transform_3, window_bounds = array<i64: 8, 128>}]} {
    %c0 = arith.constant 0 : index
    %c0_0 = arith.constant 0 : index
    %0 = vector.load %arg1[%c0, %c0_0] : memref<8x128xf32, #tpu.memory_space<vmem>>, vector<8x128xf32>
    %c0_1 = arith.constant 0 : index
    %c0_2 = arith.constant 0 : index
    %1 = vector.load %arg2[%c0_1, %c0_2] : memref<128x128xf32, #tpu.memory_space<vmem>>, vector<128x128xf32>
    %cst = arith.constant dense<0.000000e+00> : vector<8x128xf32>
    %2 = tpu.matmul %0, %1, %cst {dimension_numbers = #tpu.dot_dimension_numbers<[1], [0], [0], [1], [0, 0, 1, 1], [], []>} : vector<8x128xf32>, vector<128x128xf32>, vector<8x128xf32> -> vector<8x128xf32>
    %c0_3 = arith.constant 0 : index
    %c0_4 = arith.constant 0 : index
    %3 = vector.load %arg3[%c0_3, %c0_4] : memref<1x128xf32, #tpu.memory_space<vmem>>, vector<1x128xf32>
    %4 = vector.broadcast %3 : vector<1x128xf32> to vector<8x128xf32>
    %5 = arith.addf %2, %4 : vector<8x128xf32>
    %c0_5 = arith.constant 0 : index
    %c0_6 = arith.constant 0 : index
    %6 = vector.load %arg4[%c0_5, %c0_6] : memref<8x128xf32, #tpu.memory_space<vmem>>, vector<8x128xf32>
    tpu.vector_store %arg4[%c0_5, %c0_6], %5 {strides = array<i32>} : memref<8x128xf32, #tpu.memory_space<vmem>>, vector<8x128xf32>,
    return
  }
  func.func @transform_0(%arg0: i32) -> (i32, i32) {
    %c0_i32 = arith.constant 0 : i32
    %c0_i32_0 = arith.constant 0 : i32
    return %arg0, %c0_i32 : i32, i32
  }
  func.func @transform_1(%arg0: i32) -> (i32, i32) {
    %c0_i32 = arith.constant 0 : i32
    %c0_i32_0 = arith.constant 0 : i32
    %c0_i32_1 = arith.constant 0 : i32
    return %c0_i32, %c0_i32_0 : i32, i32
  }
  func.func @transform_2(%arg0: i32) -> (i32, i32) {
    %c0_i32 = arith.constant 0 : i32
    %c0_i32_0 = arith.constant 0 : i32
    %c0_i32_1 = arith.constant 0 : i32
    return %c0_i32, %c0_i32_0 : i32, i32
  }
  func.func @transform_3(%arg0: i32) -> (i32, i32) {
    %c0_i32 = arith.constant 0 : i32
    %c0_i32_0 = arith.constant 0 : i32
    return %arg0, %c0_i32 : i32, i32
  }
}

</mosaic_0001>

<llo_original>
// kernel: tpu_custom_call.1
$region0: #{tpu_custom_call.1}
  #allocation0 [shape = 'u32[]', space=smem, size = 0x4, offset = 0x4, fixed_abs, tag = 'smem constant byte address 0x4 - core index']
  #allocation1 [shape = 'u32[72,128]{1,0:T(1,128)}', space=vmem, size = 0x9000, scoped, tag = 'internal scratch']
  %s0 = inlined_call_operand.hbm [shape: f32[8,128], index: 0, kind: input, shape index: {}]
  %s1 = inlined_call_operand.hbm [shape: f32[128,128], index: 1, kind: input, shape index: {}]
  %s2 = inlined_call_operand.vmem [shape: f32[1,128], index: 2, kind: input, shape index: {}]
  %s3 = inlined_call_operand.hbm [shape: f32[8,128], index: 3, kind: output, shape index: {}]
  %s4 = sld [smem:[#allocation0]]
  $region30: #{tpu_custom_call.1} parent=0
    _
  %s6 = ssub.s32 1, %s4
  %s7 = scalar_select 0, %s6, %s4
  $region1: #{tpu_custom_call.1} parent=0
    #allocation2 [shape = 'u8[4096]{0}', space=vmem, size = 0x1000, scoped, tag = 'input window, operand 0, single buffered']
    #allocation3 [shape = 's32[1]{0}', space=sflag, size = 0x4, scoped, tag = 'scoped memory for tpu_custom_call.1']
    #allocation4 [shape = 's32[1]{0}', space=sflag, size = 0x4, scoped, tag = 'scoped memory for tpu_custom_call.1']
    #allocation5 [shape = 'u8[65536]{0}', space=vmem, size = 0x10000, scoped, tag = 'input window, operand 1, single buffered']
    #allocation6 [shape = 's32[1]{0}', space=sflag, size = 0x4, scoped, tag = 'scoped memory for tpu_custom_call.1']
    #allocation7 [shape = 'u8[4096]{0}', space=vmem, size = 0x1000, scoped, tag = 'output window, operand 0, single buffered']
    %8 = vsyncpa [#allocation3], 0
    %9 = vsyncpa [#allocation6], 0
    %10 = vsyncpa [#allocation4], 0
    // Predicated region
    $region2: #{tpu_custom_call.1} parent=1 // pred_check
      _
    $region3: #{tpu_custom_call.1} parent=1 // pred_check_branch
      %12 = sbr.rel (0) target = $region5
    $region4: #{tpu_custom_call.1} parent=1 // pred_region
      %14 = vsyncadd [#allocation3], 0
      %s16 = sshll.u32 %s0, 4
      %s17 = int_to_ptr.hbm [resolvable:$true] %s16
      %s18 = sshll.u32 [#allocation2], 4
      %s19 = int_to_ptr.vmem [resolvable:$true] %s18
      %21 = dma.hbm_to_vmem [thread:$0]  %s17, 128, %s19, [#allocation3]
    $region5: #{tpu_custom_call.1} parent=1 // pred_fallthru
      _
    // Predicated region
    $region6: #{tpu_custom_call.1} parent=1 // pred_check
      _
    $region7: #{tpu_custom_call.1} parent=1 // pred_check_branch
      %23 = sbr.rel (0) target = $region9
    $region8: #{tpu_custom_call.1} parent=1 // pred_region
      %25 = vsyncadd [#allocation6], 0
      %s26 = sshll.u32 %s1, 4
      %s27 = int_to_ptr.hbm [resolvable:$true] %s26
      %s28 = sshll.u32 [#allocation5], 4
      %s29 = int_to_ptr.vmem [resolvable:$true] %s28
      %34 = dma.hbm_to_vmem [thread:$0]  %s27, 2048, %s29, [#allocation6], 128, 128, 8
    $region9: #{tpu_custom_call.1} parent=1 // pred_fallthru
      _
    // Predicated region
    $region10: #{tpu_custom_call.1} parent=1 // pred_check
      _
    $region11: #{tpu_custom_call.1} parent=1 // pred_check_branch
      %36 = sbr.rel (0) target = $region13
    $region12: #{tpu_custom_call.1} parent=1 // pred_region
      _
    $region13: #{tpu_custom_call.1} parent=1 // pred_fallthru
      _
    // Predicated region
    $region14: #{tpu_custom_call.1} parent=1 // pred_check
      _
    $region15: #{tpu_custom_call.1} parent=1 // pred_check_branch
      %38 = sbr.rel (0) target = $region17
    $region16: #{tpu_custom_call.1} parent=1 // pred_region
      %40 = dma.done [#allocation3], 128
    $region17: #{tpu_custom_call.1} parent=1 // pred_fallthru
      _
    // Predicated region
    $region18: #{tpu_custom_call.1} parent=1 // pred_check
      _
    $region19: #{tpu_custom_call.1} parent=1 // pred_check_branch
      %42 = sbr.rel (0) target = $region21
    $region20: #{tpu_custom_call.1} parent=1 // pred_region
      %44 = dma.done [#allocation6], 2048
    $region21: #{tpu_custom_call.1} parent=1 // pred_fallthru
      _
    %v45 = vld [vmem:[#allocation2] sm:$0xff]
    %v46 = vld [vmem:[#allocation5] sm:$0xff]
    %v47 = vld [vmem:[#allocation5 + $0x8] sm:$0xff]
    %v48 = vld [vmem:[#allocation5 + $0x10] sm:$0xff]
    %v49 = vld [vmem:[#allocation5 + $0x18] sm:$0xff]
    %v50 = vld [vmem:[#allocation5 + $0x20] sm:$0xff]
    %v51 = vld [vmem:[#allocation5 + $0x28] sm:$0xff]
    %v52 = vld [vmem:[#allocation5 + $0x30] sm:$0xff]
    %v53 = vld [vmem:[#allocation5 + $0x38] sm:$0xff]
    %v54 = vld [vmem:[#allocation5 + $0x40] sm:$0xff]
    %v55 = vld [vmem:[#allocation5 + $0x48] sm:$0xff]
    %v56 = vld [vmem:[#allocation5 + $0x50] sm:$0xff]
    %v57 = vld [vmem:[#allocation5 + $0x58] sm:$0xff]
    %v58 = vld [vmem:[#allocation5 + $0x60] sm:$0xff]
    %v59 = vld [vmem:[#allocation5 + $0x68] sm:$0xff]
    %v60 = vld [vmem:[#allocation5 + $0x70] sm:$0xff]
    %v61 = vld [vmem:[#allocation5 + $0x78] sm:$0xff]
    %v62 = vld [vmem:[%s2] sm:$0x1]
    %v64 = vperm.slane %v62, 0
    %66 = vmatpush.msra.mxu0 %v61
    %67 = vmatpush.msra.mxu0 %v60
    %68 = vmatpush.msra.mxu0 %v59
    %69 = vmatpush.msra.mxu0 %v58
    %70 = vmatpush.msra.mxu0 %v57
    %71 = vmatpush.msra.mxu0 %v56
    %72 = vmatpush.msra.mxu0 %v55
    %73 = vmatpush.msra.mxu0 %v54
    %74 = vmatpush.msra.mxu0 %v53
    %75 = vmatpush.msra.mxu0 %v52
    %76 = vmatpush.msra.mxu0 %v51
    %77 = vmatpush.msra.mxu0 %v50
    %78 = vmatpush.msra.mxu0 %v49
    %79 = vmatpush.msra.mxu0 %v48
    %80 = vmatpush.msra.mxu0 %v47
    %81 = vmatpush.msra.mxu0 %v46
    %82 = vmatmul.f32.gmra.mxu0 %v45
    %v83 = vpop.f32.mrf.mxu0
    %v84 = vadd.f32 %v64, %v83
    %85 = vdwg.mxu0
    %86 = vst [vmem:[#allocation7] sm:$0xff] %v84
    // Predicated region
    $region22: #{tpu_custom_call.1} parent=1 // pred_check
      _
    $region23: #{tpu_custom_call.1} parent=1 // pred_check_branch
      %88 = sbr.rel (0) target = $region25
    $region24: #{tpu_custom_call.1} parent=1 // pred_region
      %90 = vsyncadd [#allocation4], 0
      %s92 = sshll.u32 [#allocation7], 4
      %s93 = int_to_ptr.vmem [resolvable:$true] %s92
      %s94 = sshll.u32 %s3, 4
      %s95 = int_to_ptr.hbm [resolvable:$true] %s94
      %97 = dma.vmem_to_hbm [thread:$0]  %s93, 128, %s95, [#allocation4]
    $region25: #{tpu_custom_call.1} parent=1 // pred_fallthru
      _
    // Predicated region
    $region26: #{tpu_custom_call.1} parent=1 // pred_check
      _
    $region27: #{tpu_custom_call.1} parent=1 // pred_check_branch
      %99 = sbr.rel (0) target = $region29
    $region28: #{tpu_custom_call.1} parent=1 // pred_region
      %101 = dma.done [#allocation4], 128
    $region29: #{tpu_custom_call.1} parent=1 // pred_fallthru
      _
    %102 = vsyncpa [#allocation3], 1
    %103 = vsyncpa [#allocation6], 1
    %104 = vsyncpa [#allocation4], 1

</llo_original>
